<compile_context>
chip_gen: v6e
topology: v6e:2x2x1
jax: 0.10.0
libtpu: 0.0.40
codegen_flags: <defaults>
</compile_context>

<pallas_src>
import functools

import jax
import jax.numpy as jnp
from jax.experimental import pallas as pl
from jax.experimental.pallas import tpu as pltpu

LN_EPS = 1e-5


def _proj_ln_kernel(x_ref, w_ref, b_ref, g_ref, beta_ref, o_ref):
    """One grid step = one of the `num_tokens` output token slices.

    x_ref    : (B_pad, clip_dim)          image embeddings (resident, bf16)
    w_ref    : (clip_dim, cross)          slice t of the transposed Linear weight (bf16)
    b_ref    : (num_tokens, cross)        full Linear bias, resident (f32)
    g_ref    : (1, cross)                 LayerNorm gamma (f32)
    beta_ref : (1, cross)                 LayerNorm beta (f32)
    o_ref    : (B_pad, cross)             output slice for token t (f32)
    """
    t = pl.program_id(0)

    # Linear: x @ W_t  (bf16 MXU matmul, f32 accumulate) + bias row t.
    y = jnp.dot(x_ref[...], w_ref[...], preferred_element_type=jnp.float32)
    y = y + b_ref[pl.ds(t, 1), :]  # (1, cross) broadcasts over rows

    # LayerNorm over the cross_attention_dim (last) axis, in f32.
    mean = jnp.mean(y, axis=-1, keepdims=True)
    centered = y - mean
    var = jnp.mean(centered * centered, axis=-1, keepdims=True)
    y_norm = centered * jax.lax.rsqrt(var + LN_EPS)
    o_ref[...] = (y_norm * g_ref[...] + beta_ref[...]).astype(o_ref.dtype)


@functools.partial(jax.jit, static_argnames=("num_tokens", "cross_dim"))
def image_proj_model_forward(image_embeds, w_t, bias, gamma, beta, *, num_tokens, cross_dim):
    """Pallas implementation of ImageProjModel.forward.

    image_embeds : (B, clip_dim) float32
    w_t          : (clip_dim, num_tokens*cross_dim) bfloat16 (PyTorch weight transposed)
    bias         : (num_tokens*cross_dim,) float32
    gamma, beta  : (cross_dim,) float32
    returns      : (B, num_tokens, cross_dim) float32
    """
    B, clip_dim = image_embeds.shape

    # Pad the batch up to a multiple of 8 sublanes so MXU / LN / stores use full vregs.
    B_pad = max(8, pl.cdiv(B, 8) * 8)
    x_p = jnp.pad(image_embeds, ((0, B_pad - B), (0, 0))).astype(w_t.dtype)

    bias2 = bias.reshape(num_tokens, cross_dim).astype(jnp.float32)
    gamma2 = gamma.reshape(1, cross_dim).astype(jnp.float32)
    beta2 = beta.reshape(1, cross_dim).astype(jnp.float32)

    # VMEM budget: double-buffered W/output tiles + resident x/bias/gamma/beta.
    # (bf16 W keeps this well under v7x's 64 MiB physical VMEM at real dims.)
    w_itemsize = jnp.dtype(w_t.dtype).itemsize
    vmem_needed = 2 * (clip_dim * cross_dim * w_itemsize      # W tile (double-buffered)
                       + B_pad * cross_dim * 4                # output tile
                       + B_pad * clip_dim * w_itemsize        # x (resident)
                       + num_tokens * cross_dim * 4           # bias (resident)
                       + 2 * cross_dim * 4)                   # gamma/beta (resident)
    vmem_limit = int(min(max(vmem_needed + (4 << 20), 32 << 20), 56 << 20))
    # TODO(synk): if the per-token W tile grows (bigger cross_dim or f32 weights),
    # add a K grid axis over clip_dim marked "arbitrary" with an f32 accumulator
    # scratch and finalize bias+LayerNorm under pl.when(k == last).

    out_flat = pl.pallas_call(
        _proj_ln_kernel,
        out_shape=jax.ShapeDtypeStruct((B_pad, num_tokens * cross_dim), jnp.float32),
        grid_spec=pltpu.PrefetchScalarGridSpec(
            num_scalar_prefetch=0,
            grid=(num_tokens,),
            in_specs=[
                pl.BlockSpec((B_pad, clip_dim), lambda t: (0, 0)),           # x (resident)
                pl.BlockSpec((clip_dim, cross_dim), lambda t: (0, t)),       # W slice t
                pl.BlockSpec((num_tokens, cross_dim), lambda t: (0, 0)),     # bias (resident)
                pl.BlockSpec((1, cross_dim), lambda t: (0, 0)),              # gamma
                pl.BlockSpec((1, cross_dim), lambda t: (0, 0)),              # beta
            ],
            out_specs=pl.BlockSpec((B_pad, cross_dim), lambda t: (0, t)),
        ),
        compiler_params=pltpu.CompilerParams(
            dimension_semantics=("parallel",),   # shards tokens across v7x's 2 TCs
            vmem_limit_bytes=vmem_limit,
        ),
    )(x_p, w_t, bias2, gamma2, beta2)

    return out_flat[:B].reshape(B, num_tokens, cross_dim)


class IPAdapterPallas:
    """Synthetic stand-in for IPAdapter: holds deterministic ImageProjModel params
    and reproduces get_image_embeds(clip_image_embeds=...) semantics."""

    def __init__(self, key, clip_embeddings_dim, cross_attention_dim, num_tokens=4):
        self.clip_dim = clip_embeddings_dim
        self.cross_dim = cross_attention_dim
        self.num_tokens = num_tokens
        out_dim = num_tokens * cross_attention_dim

        k_w, k_b = jax.random.split(key)
        # torch.nn.Linear init: U(-1/sqrt(in), 1/sqrt(in)); deterministic via PRNGKey.
        bound = 1.0 / jnp.sqrt(jnp.float32(clip_embeddings_dim))
        # Weight stored transposed as (clip_dim, out_dim) and in bf16: halves the
        # HBM byte stream of this memory-bound kernel; matmul accumulates in f32.
        self.w_t = jax.random.uniform(
            k_w, (clip_embeddings_dim, out_dim), jnp.float32, -bound, bound
        ).astype(jnp.bfloat16)
        self.bias = jax.random.uniform(k_b, (out_dim,), jnp.float32, -bound, bound)
        # LayerNorm init: gamma=1, beta=0.
        self.gamma = jnp.ones((cross_attention_dim,), jnp.float32)
        self.beta = jnp.zeros((cross_attention_dim,), jnp.float32)

    def image_proj(self, embeds):
        return image_proj_model_forward(
            embeds, self.w_t, self.bias, self.gamma, self.beta,
            num_tokens=self.num_tokens, cross_dim=self.cross_dim)

    def _uncond_embeds(self, batch):
        # zeros @ W + b == b, so the "uncond" branch is LayerNorm(bias) per token,
        # broadcast over the batch.  Computed in plain JAX: no second weight stream.
        b2 = self.bias.reshape(self.num_tokens, self.cross_dim)
        mean = b2.mean(-1, keepdims=True)
        centered = b2 - mean
        var = (centered * centered).mean(-1, keepdims=True)
        u = centered * jax.lax.rsqrt(var + LN_EPS) * self.gamma + self.beta
        return jnp.broadcast_to(u[None], (batch, self.num_tokens, self.cross_dim))

    def get_image_embeds(self, clip_image_embeds):
        image_prompt_embeds = self.image_proj(clip_image_embeds)
        uncond_image_prompt_embeds = self._uncond_embeds(clip_image_embeds.shape[0])
        return image_prompt_embeds, uncond_image_prompt_embeds


def _reference(embeds, w_t, bias, gamma, beta, num_tokens, cross_dim):
    # Match the kernel's bf16 rounding of x and W, but accumulate in f32.
    x = embeds.astype(w_t.dtype).astype(jnp.float32)
    w = w_t.astype(jnp.float32)
    y = x @ w + bias
    y = y.reshape(-1, num_tokens, cross_dim)
    mean = y.mean(-1, keepdims=True)
    var = ((y - mean) ** 2).mean(-1, keepdims=True)
    return (y - mean) / jnp.sqrt(var + LN_EPS) * gamma + beta


if __name__ == "__main__":
    # Small shapes consistent with the module (real model: clip_dim=1024/1280,
    # cross_dim=2048, num_tokens=4). Keep dims 128-aligned.
    B = 2
    CLIP_DIM = 256
    CROSS_DIM = 256
    NUM_TOKENS = 4

    key = jax.random.PRNGKey(0)
    k_params, k_x = jax.random.split(key)

    adapter = IPAdapterPallas(k_params, CLIP_DIM, CROSS_DIM, num_tokens=NUM_TOKENS)
    clip_image_embeds = jax.random.normal(k_x, (B, CLIP_DIM), jnp.float32)

    img_embeds, uncond_embeds = adapter.get_image_embeds(clip_image_embeds)
    jax.block_until_ready((img_embeds, uncond_embeds))

    # Correctness check against pure-JAX reference.
    ref_img = _reference(clip_image_embeds, adapter.w_t, adapter.bias,
                         adapter.gamma, adapter.beta, NUM_TOKENS, CROSS_DIM)
    ref_unc = _reference(jnp.zeros_like(clip_image_embeds), adapter.w_t, adapter.bias,
                         adapter.gamma, adapter.beta, NUM_TOKENS, CROSS_DIM)
    assert img_embeds.shape == (B, NUM_TOKENS, CROSS_DIM)
    assert uncond_embeds.shape == (B, NUM_TOKENS, CROSS_DIM)
    assert jnp.allclose(img_embeds, ref_img, atol=1e-2, rtol=1e-2)
    assert jnp.allclose(uncond_embeds, ref_unc, atol=1e-4, rtol=1e-4)

    print("KERNEL_OK")
</pallas_src>

<mosaic_0001>
module attributes {stable_mosaic.version = 11 : i64} {
  func.func @_proj_ln_kernel(%arg0: i32, %arg1: memref<8x256xbf16, #tpu.memory_space<vmem>>, %arg2: memref<256x256xbf16, #tpu.memory_space<vmem>>, %arg3: memref<4x256xf32, #tpu.memory_space<vmem>>, %arg4: memref<1x256xf32, #tpu.memory_space<vmem>>, %arg5: memref<1x256xf32, #tpu.memory_space<vmem>>, %arg6: memref<8x256xf32, #tpu.memory_space<vmem>>) attributes {dimension_semantics = [#tpu.dimension_semantics<parallel>], iteration_bounds = array<i64: 4>, scalar_prefetch = 0 : i64, scratch_operands = 0 : i64, tpu.core_type = #tpu.core_type<tc>, window_params = [{pipeline_mode = #tpu.pipeline_mode<synchronous>, transform_indices = @transform_0, window_bounds = array<i64: 8, 256>}, {transform_indices = @transform_1, window_bounds = array<i64: 256, 256>}, {pipeline_mode = #tpu.pipeline_mode<synchronous>, transform_indices = @transform_2, window_bounds = array<i64: 4, 256>}, {pipeline_mode = #tpu.pipeline_mode<synchronous>, transform_indices = @transform_3, window_bounds = array<i64: 1, 256>}, {pipeline_mode = #tpu.pipeline_mode<synchronous>, transform_indices = @transform_4, window_bounds = array<i64: 1, 256>}, {transform_indices = @transform_5, window_bounds = array<i64: 8, 256>}]} {
    %c0 = arith.constant 0 : index
    %c0_0 = arith.constant 0 : index
    %0 = vector.load %arg1[%c0, %c0_0] : memref<8x256xbf16, #tpu.memory_space<vmem>>, vector<8x256xbf16>
    %c0_1 = arith.constant 0 : index
    %c0_2 = arith.constant 0 : index
    %1 = vector.load %arg2[%c0_1, %c0_2] : memref<256x256xbf16, #tpu.memory_space<vmem>>, vector<256x256xbf16>
    %cst = arith.constant dense<0.000000e+00> : vector<8x256xf32>
    %2 = tpu.matmul %0, %1, %cst {dimension_numbers = #tpu.dot_dimension_numbers<[1], [0], [0], [1], [0, 0, 1, 1], [], []>} : vector<8x256xbf16>, vector<256x256xbf16>, vector<8x256xf32> -> vector<8x256xf32>
    %3 = arith.index_cast %arg0 : i32 to index
    %c0_3 = arith.constant 0 : index
    %4 = vector.load %arg3[%3, %c0_3] : memref<4x256xf32, #tpu.memory_space<vmem>>, vector<1x256xf32>
    %5 = vector.broadcast %4 : vector<1x256xf32> to vector<8x256xf32>
    %6 = arith.addf %2, %5 : vector<8x256xf32>
    %cst_4 = arith.constant dense<0.000000e+00> : vector<8xf32>
    %7 = vector.multi_reduction <add>, %6, %cst_4 [1] : vector<8x256xf32> to vector<8xf32>
    %8 = vector.shape_cast %7 : vector<8xf32> to vector<8x1xf32>
    %cst_5 = arith.constant 2.560000e+02 : f32
    %9 = vector.broadcast %cst_5 : f32 to vector<8x1xf32>
    %10 = arith.divf %8, %9 : vector<8x1xf32>
    %11 = vector.broadcast %10 : vector<8x1xf32> to vector<8x256xf32>
    %12 = arith.subf %6, %11 : vector<8x256xf32>
    %13 = arith.mulf %12, %12 : vector<8x256xf32>
    %cst_6 = arith.constant dense<0.000000e+00> : vector<8xf32>
    %14 = vector.multi_reduction <add>, %13, %cst_6 [1] : vector<8x256xf32> to vector<8xf32>
    %15 = vector.shape_cast %14 : vector<8xf32> to vector<8x1xf32>
    %cst_7 = arith.constant 2.560000e+02 : f32
    %16 = vector.broadcast %cst_7 : f32 to vector<8x1xf32>
    %17 = arith.divf %15, %16 : vector<8x1xf32>
    %cst_8 = arith.constant 9.99999974E-6 : f32
    %18 = vector.broadcast %cst_8 : f32 to vector<8x1xf32>
    %19 = arith.addf %17, %18 : vector<8x1xf32>
    %20 = math.rsqrt %19 : vector<8x1xf32>
    %21 = vector.broadcast %20 : vector<8x1xf32> to vector<8x256xf32>
    %22 = arith.mulf %12, %21 : vector<8x256xf32>
    %c0_9 = arith.constant 0 : index
    %c0_10 = arith.constant 0 : index
    %23 = vector.load %arg4[%c0_9, %c0_10] : memref<1x256xf32, #tpu.memory_space<vmem>>, vector<1x256xf32>
    %24 = vector.broadcast %23 : vector<1x256xf32> to vector<8x256xf32>
    %25 = arith.mulf %22, %24 : vector<8x256xf32>
    %c0_11 = arith.constant 0 : index
    %c0_12 = arith.constant 0 : index
    %26 = vector.load %arg5[%c0_11, %c0_12] : memref<1x256xf32, #tpu.memory_space<vmem>>, vector<1x256xf32>
    %27 = vector.broadcast %26 : vector<1x256xf32> to vector<8x256xf32>
    %28 = arith.addf %25, %27 : vector<8x256xf32>
    %c0_13 = arith.constant 0 : index
    %c0_14 = arith.constant 0 : index
    %29 = vector.load %arg6[%c0_13, %c0_14] : memref<8x256xf32, #tpu.memory_space<vmem>>, vector<8x256xf32>
    tpu.vector_store %arg6[%c0_13, %c0_14], %28 {strides = array<i32>} : memref<8x256xf32, #tpu.memory_space<vmem>>, vector<8x256xf32>,
    return
  }
  func.func @transform_0(%arg0: i32) -> (i32, i32) {
    %c0_i32 = arith.constant 0 : i32
    %c0_i32_0 = arith.constant 0 : i32
    %c0_i32_1 = arith.constant 0 : i32
    return %c0_i32, %c0_i32_0 : i32, i32
  }
  func.func @transform_1(%arg0: i32) -> (i32, i32) {
    %c0_i32 = arith.constant 0 : i32
    %c0_i32_0 = arith.constant 0 : i32
    return %c0_i32, %arg0 : i32, i32
  }
  func.func @transform_2(%arg0: i32) -> (i32, i32) {
    %c0_i32 = arith.constant 0 : i32
    %c0_i32_0 = arith.constant 0 : i32
    %c0_i32_1 = arith.constant 0 : i32
    return %c0_i32, %c0_i32_0 : i32, i32
  }
  func.func @transform_3(%arg0: i32) -> (i32, i32) {
    %c0_i32 = arith.constant 0 : i32
    %c0_i32_0 = arith.constant 0 : i32
    %c0_i32_1 = arith.constant 0 : i32
    return %c0_i32, %c0_i32_0 : i32, i32
  }
  func.func @transform_4(%arg0: i32) -> (i32, i32) {
    %c0_i32 = arith.constant 0 : i32
    %c0_i32_0 = arith.constant 0 : i32
    %c0_i32_1 = arith.constant 0 : i32
    return %c0_i32, %c0_i32_0 : i32, i32
  }
  func.func @transform_5(%arg0: i32) -> (i32, i32) {
    %c0_i32 = arith.constant 0 : i32
    %c0_i32_0 = arith.constant 0 : i32
    return %c0_i32, %arg0 : i32, i32
  }
}

</mosaic_0001>

<llo_original>
// kernel: image_proj_model_forward.1
$region0: #{image_proj_model_forward.1}
  #allocation0 [shape = 'u32[]', space=smem, size = 0x4, offset = 0x4, fixed_abs, tag = 'smem constant byte address 0x4 - core index']
  #allocation1 [shape = 'u32[144,128]{1,0:T(1,128)}', space=vmem, size = 0x12000, scoped, tag = 'internal scratch']
  %s0 = inlined_call_operand.vmem [shape: bf16[8,256], index: 0, kind: input, shape index: {}]
  %s1 = inlined_call_operand.hbm [shape: bf16[256,1024], index: 1, kind: input, shape index: {}]
  %s2 = inlined_call_operand.vmem [shape: f32[4,256], index: 2, kind: input, shape index: {}]
  %s3 = inlined_call_operand.vmem [shape: f32[1,256], index: 3, kind: input, shape index: {}]
  %s4 = inlined_call_operand.vmem [shape: f32[1,256], index: 4, kind: input, shape index: {}]
  %s5 = inlined_call_operand.vmem [shape: f32[8,1024], index: 5, kind: output, shape index: {}]
  %s6 = sld [smem:[#allocation0]]
  $region57: #{image_proj_model_forward.1} parent=0
    _
  %s8 = ssub.s32 1, %s6
  %s9 = scalar_select 0, %s8, %s6
  $region1: #{image_proj_model_forward.1} parent=0
    #allocation2 [shape = 'u8[262144]{0}', space=vmem, size = 0x40000, scoped, tag = 'input window, operand 1']
    #allocation3 [shape = 's32[2]{0}', space=sflag, size = 0x8, scoped, tag = 'scoped memory for image_proj_model_forward.1']
    %10 = vsyncpa [#allocation3], 0
    %s11 = scalar_lea.sflag [#allocation3], 1
    %12 = vsyncpa %s11, 0
    loop: start=0, step=1, limit=6
    $region2: #{image_proj_model_forward.1} parent=1 // loop_pre_header
      _
    $region3: #{image_proj_model_forward.1} parent=1 // loop_header
      %s14 = sphi 0, %s18
      %p15 = scmp.ge.s32.totalorder %s14, 6
      %s22 = sphi 0, %s22
      %s24 = sphi 0, %s22
      %s25 = sphi 0, %s24
      %s39 = sphi 0, %s25
      %s45 = sphi 0, %s47
      %s48 = sphi 0, %s45
      %s49 = sphi 0, %s48
      %s65 = sphi 0, %s49
      %s69 = sphi 0, %s69
      %s71 = sphi 0, %s69
      %s72 = sphi 0, %s71
      %s86 = sphi 0, %s72
      %s90 = sphi 0, %s90
      %s92 = sphi 0, %s90
      %s93 = sphi 0, %s92
      %s107 = sphi 0, %s93
      %s111 = sphi 0, %s111
      %s113 = sphi 0, %s111
      %s114 = sphi 0, %s113
      %s128 = sphi 0, %s114
      %s134 = sphi 0, %s136
      %s137 = sphi 0, %s134
      %s138 = sphi 0, %s137
      %s154 = sphi 0, %s138
    $region4: #{image_proj_model_forward.1} parent=1 // loop_header_branch
      %17 = sbr.rel (%p15) target = $region8
    $region5: #{image_proj_model_forward.1} parent=1 // loop_body
      %s19 = ssub.s32 %s14, 1
      %s20 = ssub.s32 %s14, 2
      %s21 = sadd.s32 %s14, 1
      %s23 = sadd.s32 %s22, 1
      %p26 = scmp.eq.s32.totalorder %s14, 3
      %p27 = scmp.ne.s32.totalorder %s22, %s24
      %p28 = scmp.eq.s32.totalorder %s14, 0
      %p29 = por %p27, %p28
      %p30 = scmp.ne.s32.totalorder %s22, %s24
      %p31 = scmp.eq.s32.totalorder %s19, 3
      %p32 = por %p30, %p31
      %p33 = scmp.ne.s32.totalorder %s24, %s25
      %p34 = scmp.eq.s32.totalorder %s19, 0
      %p35 = por %p33, %p34
      %p36 = scmp.ne.s32.totalorder %s24, %s25
      %p37 = scmp.eq.s32.totalorder %s20, 3
      %p38 = por %p36, %p37
      %p40 = scmp.ne.s32.totalorder %s25, %s39
      %p41 = scmp.eq.s32.totalorder %s20, 0
      %p42 = por %p40, %p41
      %s43 = ssub.s32 %s14, %s21
      %p44 = scmp.eq.s32.totalorder %s43, 0
      %s46 = sadd.s32 %s45, 1
      %s47 = scalar_select %p44, %s45, %s46
      %p50 = pneg %p44
      %p51 = scmp.eq.s32.totalorder %s14, 3
      %p52 = por %p50, %p51
      %p53 = scmp.ne.s32.totalorder %s45, %s48
      %p54 = scmp.eq.s32.totalorder %s14, 0
      %p55 = por %p53, %p54
      %p56 = scmp.ne.s32.totalorder %s45, %s48
      %p57 = scmp.eq.s32.totalorder %s19, 3
      %p58 = por %p56, %p57
      %p59 = scmp.ne.s32.totalorder %s48, %s49
      %p60 = scmp.eq.s32.totalorder %s19, 0
      %p61 = por %p59, %p60
      %p62 = scmp.ne.s32.totalorder %s48, %s49
      %p63 = scmp.eq.s32.totalorder %s20, 3
      %p64 = por %p62, %p63
      %p66 = scmp.ne.s32.totalorder %s49, %s65
      %p67 = scmp.eq.s32.totalorder %s20, 0
      %p68 = por %p66, %p67
      %s70 = sadd.s32 %s69, 1
      %p73 = scmp.eq.s32.totalorder %s14, 3
      %p74 = scmp.ne.s32.totalorder %s69, %s71
      %p75 = scmp.eq.s32.totalorder %s14, 0
      %p76 = por %p74, %p75
      %p77 = scmp.ne.s32.totalorder %s69, %s71
      %p78 = scmp.eq.s32.totalorder %s19, 3
      %p79 = por %p77, %p78
      %p80 = scmp.ne.s32.totalorder %s71, %s72
      %p81 = scmp.eq.s32.totalorder %s19, 0
      %p82 = por %p80, %p81
      %p83 = scmp.ne.s32.totalorder %s71, %s72
      %p84 = scmp.eq.s32.totalorder %s20, 3
      %p85 = por %p83, %p84
      %p87 = scmp.ne.s32.totalorder %s72, %s86
      %p88 = scmp.eq.s32.totalorder %s20, 0
      %p89 = por %p87, %p88
      %s91 = sadd.s32 %s90, 1
      %p94 = scmp.eq.s32.totalorder %s14, 3
      %p95 = scmp.ne.s32.totalorder %s90, %s92
      %p96 = scmp.eq.s32.totalorder %s14, 0
      %p97 = por %p95, %p96
      %p98 = scmp.ne.s32.totalorder %s90, %s92
      %p99 = scmp.eq.s32.totalorder %s19, 3
      %p100 = por %p98, %p99
      %p101 = scmp.ne.s32.totalorder %s92, %s93
      %p102 = scmp.eq.s32.totalorder %s19, 0
      %p103 = por %p101, %p102
      %p104 = scmp.ne.s32.totalorder %s92, %s93
      %p105 = scmp.eq.s32.totalorder %s20, 3
      %p106 = por %p104, %p105
      %p108 = scmp.ne.s32.totalorder %s93, %s107
      %p109 = scmp.eq.s32.totalorder %s20, 0
      %p110 = por %p108, %p109
      %s112 = sadd.s32 %s111, 1
      %p115 = scmp.eq.s32.totalorder %s14, 3
      %p116 = scmp.ne.s32.totalorder %s111, %s113
      %p117 = scmp.eq.s32.totalorder %s14, 0
      %p118 = por %p116, %p117
      %p119 = scmp.ne.s32.totalorder %s111, %s113
      %p120 = scmp.eq.s32.totalorder %s19, 3
      %p121 = por %p119, %p120
      %p122 = scmp.ne.s32.totalorder %s113, %s114
      %p123 = scmp.eq.s32.totalorder %s19, 0
      %p124 = por %p122, %p123
      %p125 = scmp.ne.s32.totalorder %s113, %s114
      %p126 = scmp.eq.s32.totalorder %s20, 3
      %p127 = por %p125, %p126
      %p129 = scmp.ne.s32.totalorder %s114, %s128
      %p130 = scmp.eq.s32.totalorder %s20, 0
      %p131 = por %p129, %p130
      %s132 = ssub.s32 %s14, %s21
      %p133 = scmp.eq.s32.totalorder %s132, 0
      %s135 = sadd.s32 %s134, 1
      %s136 = scalar_select %p133, %s134, %s135
      %p139 = pneg %p133
      %p140 = scmp.eq.s32.totalorder %s14, 3
      %p141 = por %p139, %p140
      %p142 = scmp.ne.s32.totalorder %s134, %s137
      %p143 = scmp.eq.s32.totalorder %s14, 0
      %p144 = por %p142, %p143
      %p145 = scmp.ne.s32.totalorder %s134, %s137
      %p146 = scmp.eq.s32.totalorder %s19, 3
      %p147 = por %p145, %p146
      %p148 = scmp.ne.s32.totalorder %s137, %s138
      %p149 = scmp.eq.s32.totalorder %s19, 0
      %p150 = por %p148, %p149
      %p151 = scmp.ne.s32.totalorder %s137, %s138
      %p152 = scmp.eq.s32.totalorder %s20, 3
      %p153 = por %p151, %p152
      %p155 = scmp.ne.s32.totalorder %s138, %s154
      %p156 = scmp.eq.s32.totalorder %s20, 0
      %p157 = por %p155, %p156
      %p158 = scmp.le.s32.totalorder 1, %s14
      %p159 = scmp.lt.s32.totalorder %s14, 5
      %p160 = pnand %p158, %p159
      %p161 = pneg %p160
      // Predicated region
      $region9: #{image_proj_model_forward.1} parent=5 // pred_check
        _
      $region10: #{image_proj_model_forward.1} parent=5 // pred_check_branch
        %163 = sbr.rel (%p160) target = $region12
      $region11: #{image_proj_model_forward.1} parent=5 // pred_region
        %s164 = ssub.s32 %s14, 1
        // Predicated region
        $region13: #{image_proj_model_forward.1} parent=11 // pred_check
          %p165 = pneg %p35
        $region14: #{image_proj_model_forward.1} parent=11 // pred_check_branch
          %167 = sbr.rel (%p165) target = $region16
        $region15: #{image_proj_model_forward.1} parent=11 // pred_region
          _
        $region16: #{image_proj_model_forward.1} parent=11 // pred_fallthru
          _
        // Predicated region
        $region17: #{image_proj_model_forward.1} parent=11 // pred_check
          %p168 = pneg %p82
        $region18: #{image_proj_model_forward.1} parent=11 // pred_check_branch
          %170 = sbr.rel (%p168) target = $region20
        $region19: #{image_proj_model_forward.1} parent=11 // pred_region
          _
        $region20: #{image_proj_model_forward.1} parent=11 // pred_fallthru
          _
        // Predicated region
        $region21: #{image_proj_model_forward.1} parent=11 // pred_check
          %p171 = pneg %p103
        $region22: #{image_proj_model_forward.1} parent=11 // pred_check_branch
          %173 = sbr.rel (%p171) target = $region24
        $region23: #{image_proj_model_forward.1} parent=11 // pred_region
          _
        $region24: #{image_proj_model_forward.1} parent=11 // pred_fallthru
          _
        // Predicated region
        $region25: #{image_proj_model_forward.1} parent=11 // pred_check
          %p174 = pneg %p124
        $region26: #{image_proj_model_forward.1} parent=11 // pred_check_branch
          %176 = sbr.rel (%p174) target = $region28
        $region27: #{image_proj_model_forward.1} parent=11 // pred_region
          _
        $region28: #{image_proj_model_forward.1} parent=11 // pred_fallthru
          _
      $region12: #{image_proj_model_forward.1} parent=5 // pred_fallthru
        _
      %p177 = scmp.lt.s32.totalorder %s14, 4
      // Predicated region
      $region29: #{image_proj_model_forward.1} parent=5 // pred_check
        %p178 = pneg %p177
      $region30: #{image_proj_model_forward.1} parent=5 // pred_check_branch
        %180 = sbr.rel (%p178) target = $region32
      $region31: #{image_proj_model_forward.1} parent=5 // pred_region
        // Predicated region
        $region33: #{image_proj_model_forward.1} parent=31 // pred_check
          %p181 = pneg %p55
        $region34: #{image_proj_model_forward.1} parent=31 // pred_check_branch
          %183 = sbr.rel (%p181) target = $region36
        $region35: #{image_proj_model_forward.1} parent=31 // pred_region
          %s184 = sand.u32 %s45, 1
          %s185 = scalar_lea.sflag [#allocation3], %s184
          %s186 = sand.u32 %s45, 1
          %s187 = smul.addr %s186, 256
          %s188 = scalar_lea.vmem [#allocation2], %s187
          %s189 = smul.u32 2, %s14
          %s191 = ssub.s32 4096, 4096
          %192 = vsyncadd %s185, %s191
          %s193 = smul.addr %s189, 64
          %s194 = scalar_lea.hbm %s1, %s193
          %s195 = sshll.u32 %s188, 4
          %s196 = int_to_ptr.vmem [resolvable:$true] %s195
          %201 = dma.hbm_to_vmem [thread:$0]  %s194, 4096, %s196, %s185, 512, 128, 8
        $region36: #{image_proj_model_forward.1} parent=31 // pred_fallthru
          _
      $region32: #{image_proj_model_forward.1} parent=5 // pred_fallthru
        _
      %p202 = scmp.le.s32.totalorder 1, %s14
      %p203 = scmp.lt.s32.totalorder %s14, 5
      %p204 = pnand %p202, %p203
      %p205 = pneg %p204
      // Predicated region
      $region37: #{image_proj_model_forward.1} parent=5 // pred_check
        _
      $region38: #{image_proj_model_forward.1} parent=5 // pred_check_branch
        %207 = sbr.rel (%p204) target = $region40
      $region39: #{image_proj_model_forward.1} parent=5 // pred_region
        %s208 = ssub.s32 %s14, 1
        %s209 = sand.u32 %s48, 1
        %s210 = scalar_lea.sflag [#allocation3], %s209
        %s211 = sand.u32 %s48, 1
        %s212 = smul.addr %s211, 256
        %s213 = scalar_lea.vmem [#allocation2], %s212
        // Predicated region
        $region41: #{image_proj_model_forward.1} parent=39 // pred_check
          %p214 = pneg %p61
        $region42: #{image_proj_model_forward.1} parent=39 // pred_check_branch
          %216 = sbr.rel (%p214) target = $region44
        $region43: #{image_proj_model_forward.1} parent=39 // pred_region
          %217 = dma.done %s210, 4096
        $region44: #{image_proj_model_forward.1} parent=39 // pred_fallthru
          _
        %p218 = pneg %p35
        %p219 = pneg %p32
        %s220 = sand.u32 %s48, 1
        %s221 = scalar_lea.sflag [#allocation3], %s220
        %s222 = sand.u32 %s48, 1
        %s223 = smul.addr %s222, 256
        %s224 = scalar_lea.vmem [#allocation2], %s223
        %p225 = pneg %p61
        %p226 = pneg %p58
        %p227 = pneg %p82
        %p228 = pneg %p79
        %p229 = pneg %p103
        %p230 = pneg %p100
        %p231 = pneg %p124
        %p232 = pneg %p121
        %p233 = pneg %p150
        %p234 = pneg %p147
        %s235 = smul.u32 2, %s19
        %p236 = scmp.lt.s32.totalorder %s235, 7
        %s237 = scalar_select %p236, %s235, 7
        %s238 = smul.addr %s237, 8
        %s239 = scalar_lea.vmem %s5, %s238
        %s240 = smul.u32 2, %s19
        %s241 = smul.u32 2, %s19
        %p242 = scmp.lt.s32.totalorder %s241, 7
        %s243 = scalar_select %p242, %s241, 7
        %s244 = smul.addr %s243, 8
        %s245 = scalar_lea.vmem %s5, %s244
        %s246 = smul.u32 2, %s19
        %v247 = vld [vmem:[%s0] sm:$0xff]
        %v248 = vld [vmem:[%s213] sm:$0xff]
        %v249 = vld [vmem:[%s213 + $0x8] sm:$0xff]
        %v250 = vld [vmem:[%s213 + $0x10] sm:$0xff]
        %v251 = vld [vmem:[%s213 + $0x18] sm:$0xff]
        %v252 = vld [vmem:[%s213 + $0x20] sm:$0xff]
        %v253 = vld [vmem:[%s213 + $0x28] sm:$0xff]
        %v254 = vld [vmem:[%s213 + $0x30] sm:$0xff]
        %v255 = vld [vmem:[%s213 + $0x38] sm:$0xff]
        %v256 = vld [vmem:[%s213 + $0x40] sm:$0xff]
        %v257 = vld [vmem:[%s213 + $0x48] sm:$0xff]
        %v258 = vld [vmem:[%s213 + $0x50] sm:$0xff]
        %v259 = vld [vmem:[%s213 + $0x58] sm:$0xff]
        %v260 = vld [vmem:[%s213 + $0x60] sm:$0xff]
        %v261 = vld [vmem:[%s213 + $0x68] sm:$0xff]
        %v262 = vld [vmem:[%s213 + $0x70] sm:$0xff]
        %v263 = vld [vmem:[%s213 + $0x78] sm:$0xff]
        %v264 = vld [vmem:[%s213 + $0x80] sm:$0xff]
        %v265 = vld [vmem:[%s213 + $0x88] sm:$0xff]
        %v266 = vld [vmem:[%s213 + $0x90] sm:$0xff]
        %v267 = vld [vmem:[%s213 + $0x98] sm:$0xff]
        %v268 = vld [vmem:[%s213 + $0xa0] sm:$0xff]
        %v269 = vld [vmem:[%s213 + $0xa8] sm:$0xff]
        %v270 = vld [vmem:[%s213 + $0xb0] sm:$0xff]
        %v271 = vld [vmem:[%s213 + $0xb8] sm:$0xff]
        %v272 = vld [vmem:[%s213 + $0xc0] sm:$0xff]
        %v273 = vld [vmem:[%s213 + $0xc8] sm:$0xff]
        %v274 = vld [vmem:[%s213 + $0xd0] sm:$0xff]
        %v275 = vld [vmem:[%s213 + $0xd8] sm:$0xff]
        %v276 = vld [vmem:[%s213 + $0xe0] sm:$0xff]
        %v277 = vld [vmem:[%s213 + $0xe8] sm:$0xff]
        %v278 = vld [vmem:[%s213 + $0xf0] sm:$0xff]
        %v279 = vld [vmem:[%s213 + $0xf8] sm:$0xff]
        %s280 = sshra.s32 %s19, 2
        %s281 = sand.u32 %s19, 3
        %s282 = sshra.s32 %s19, 2
        %s283 = sand.u32 %s19, 3
        %s284 = smul.u32 %s280, 2
        %s285 = smul.u32 %s284, 4
        %s286 = sadd.s32 %s285, %s283
        %s287 = scalar_lea.vmem %s2, %s286
        %v288 = vld [vmem:[%s287] ss:$4 sm:$0x3]
        %v290 = vlaneseq
        %v291 = vshrl.u32 %v290, 7
        %v292 = vsub.s32 0, %v291
        %v293 = vrot.slane %v288, %v292
        %v294 = vlaneseq
        %v295 = vshrl.u32 %v294, 7
        %v296 = vsub.s32 1, %v295
        %v297 = vrot.slane %v288, %v296
        %v301 = vunpack.c.l.b16 %v247
        %v302 = vunpack.c.h.b16 %v247
        %v303 = vpack.c.b16 %v301, %v301
        %v304 = vpack.c.b16 %v302, %v302
        %v339 = vunpack.c.l.b16 %v248
        %v340 = vunpack.c.h.b16 %v248
        %v341 = vunpack.c.l.b16 %v249
        %v342 = vunpack.c.h.b16 %v249
        %v343 = vunpack.c.l.b16 %v250
        %v344 = vunpack.c.h.b16 %v250
        %v345 = vunpack.c.l.b16 %v251
        %v346 = vunpack.c.h.b16 %v251
        %v347 = vunpack.c.l.b16 %v252
        %v348 = vunpack.c.h.b16 %v252
        %v349 = vunpack.c.l.b16 %v253
        %v350 = vunpack.c.h.b16 %v253
        %v351 = vunpack.c.l.b16 %v254
        %v352 = vunpack.c.h.b16 %v254
        %v353 = vunpack.c.l.b16 %v255
        %v354 = vunpack.c.h.b16 %v255
        %v355 = vunpack.c.l.b16 %v256
        %v356 = vunpack.c.h.b16 %v256
        %v357 = vunpack.c.l.b16 %v257
        %v358 = vunpack.c.h.b16 %v257
        %v359 = vunpack.c.l.b16 %v258
        %v360 = vunpack.c.h.b16 %v258
        %v361 = vunpack.c.l.b16 %v259
        %v362 = vunpack.c.h.b16 %v259
        %v363 = vunpack.c.l.b16 %v260
        %v364 = vunpack.c.h.b16 %v260
        %v365 = vunpack.c.l.b16 %v261
        %v366 = vunpack.c.h.b16 %v261
        %v367 = vunpack.c.l.b16 %v262
        %v368 = vunpack.c.h.b16 %v262
        %v369 = vunpack.c.l.b16 %v263
        %v370 = vunpack.c.h.b16 %v263
        %v371 = vunpack.c.l.b16 %v264
        %v372 = vunpack.c.h.b16 %v264
        %v373 = vunpack.c.l.b16 %v265
        %v374 = vunpack.c.h.b16 %v265
        %v375 = vunpack.c.l.b16 %v266
        %v376 = vunpack.c.h.b16 %v266
        %v377 = vunpack.c.l.b16 %v267
        %v378 = vunpack.c.h.b16 %v267
        %v379 = vunpack.c.l.b16 %v268
        %v380 = vunpack.c.h.b16 %v268
        %v381 = vunpack.c.l.b16 %v269
        %v382 = vunpack.c.h.b16 %v269
        %v383 = vunpack.c.l.b16 %v270
        %v384 = vunpack.c.h.b16 %v270
        %v385 = vunpack.c.l.b16 %v271
        %v386 = vunpack.c.h.b16 %v271
        %v387 = vunpack.c.l.b16 %v272
        %v388 = vunpack.c.h.b16 %v272
        %v389 = vunpack.c.l.b16 %v273
        %v390 = vunpack.c.h.b16 %v273
        %v391 = vunpack.c.l.b16 %v274
        %v392 = vunpack.c.h.b16 %v274
        %v393 = vunpack.c.l.b16 %v275
        %v394 = vunpack.c.h.b16 %v275
        %v395 = vunpack.c.l.b16 %v276
        %v396 = vunpack.c.h.b16 %v276
        %v397 = vunpack.c.l.b16 %v277
        %v398 = vunpack.c.h.b16 %v277
        %v399 = vunpack.c.l.b16 %v278
        %v400 = vunpack.c.h.b16 %v278
        %v401 = vunpack.c.l.b16 %v279
        %v402 = vunpack.c.h.b16 %v279
        %v403 = vpack.c.b16 %v341, %v339
        %v404 = vpack.c.b16 %v342, %v340
        %v405 = vpack.c.b16 %v345, %v343
        %v406 = vpack.c.b16 %v346, %v344
        %v407 = vpack.c.b16 %v349, %v347
        %v408 = vpack.c.b16 %v350, %v348
        %v409 = vpack.c.b16 %v353, %v351
        %v410 = vpack.c.b16 %v354, %v352
        %v411 = vpack.c.b16 %v357, %v355
        %v412 = vpack.c.b16 %v358, %v356
        %v413 = vpack.c.b16 %v361, %v359
        %v414 = vpack.c.b16 %v362, %v360
        %v415 = vpack.c.b16 %v365, %v363
        %v416 = vpack.c.b16 %v366, %v364
        %v417 = vpack.c.b16 %v369, %v367
        %v418 = vpack.c.b16 %v370, %v368
        %v419 = vpack.c.b16 %v373, %v371
        %v420 = vpack.c.b16 %v374, %v372
        %v421 = vpack.c.b16 %v377, %v375
        %v422 = vpack.c.b16 %v378, %v376
        %v423 = vpack.c.b16 %v381, %v379
        %v424 = vpack.c.b16 %v382, %v380
        %v425 = vpack.c.b16 %v385, %v383
        %v426 = vpack.c.b16 %v386, %v384
        %v427 = vpack.c.b16 %v389, %v387
        %v428 = vpack.c.b16 %v390, %v388
        %v429 = vpack.c.b16 %v393, %v391
        %v430 = vpack.c.b16 %v394, %v392
        %v431 = vpack.c.b16 %v397, %v395
        %v432 = vpack.c.b16 %v398, %v396
        %v433 = vpack.c.b16 %v401, %v399
        %v434 = vpack.c.b16 %v402, %v400
        %467 = vmatprep.subr.bf16.mxu0 %v418
        %468 = vmatpush1.bf16.msra.mxu0 %v417
        %469 = vmatprep.subr.bf16.mxu0 %v416
        %470 = vmatpush1.bf16.msra.mxu0 %v415
        %471 = vmatprep.subr.bf16.mxu0 %v414
        %472 = vmatpush1.bf16.msra.mxu0 %v413
        %473 = vmatprep.subr.bf16.mxu0 %v412
        %474 = vmatpush1.bf16.msra.mxu0 %v411
        %475 = vmatprep.subr.bf16.mxu0 %v410
        %476 = vmatpush1.bf16.msra.mxu0 %v409
        %477 = vmatprep.subr.bf16.mxu0 %v408
        %478 = vmatpush1.bf16.msra.mxu0 %v407
        %479 = vmatprep.subr.bf16.mxu0 %v406
        %480 = vmatpush1.bf16.msra.mxu0 %v405
        %481 = vmatprep.subr.bf16.mxu0 %v404
        %482 = vmatpush1.bf16.msra.mxu0 %v403
        %483 = vmatprep.subr.bf16.mxu0 %v434
        %484 = vmatpush2.bf16.msra.mxu0 %v433
        %485 = vmatprep.subr.bf16.mxu0 %v432
        %486 = vmatpush2.bf16.msra.mxu0 %v431
        %487 = vmatprep.subr.bf16.mxu0 %v430
        %488 = vmatpush2.bf16.msra.mxu0 %v429
        %489 = vmatprep.subr.bf16.mxu0 %v428
        %490 = vmatpush2.bf16.msra.mxu0 %v427
        %491 = vmatprep.subr.bf16.mxu0 %v426
        %492 = vmatpush2.bf16.msra.mxu0 %v425
        %493 = vmatprep.subr.bf16.mxu0 %v424
        %494 = vmatpush2.bf16.msra.mxu0 %v423
        %495 = vmatprep.subr.bf16.mxu0 %v422
        %496 = vmatpush2.bf16.msra.mxu0 %v421
        %497 = vmatprep.subr.bf16.mxu0 %v420
        %498 = vmatpush2.bf16.msra.mxu0 %v419
        %499 = vmatprep.mubr.bf16.mxu0 %v304
        %500 = vmatmul.mubr.bf16.gmra.mxu0 %v303
        %v501 = vpop.f32.mrf.mxu0
        %v502 = vadd.f32 %v293, %v501
        %v503 = vpop.f32.mrf.mxu0
        %v504 = vadd.f32 %v297, %v503
        %v505 = vpop.f32.mrf.mxu0
        %v506 = vpop.f32.mrf.mxu0
        %507 = vdwg.mxu0
        %v508 = vadd.f32 %v502, %v504
        %509 = vadd.xlane.f32.xlu0 %v508
        %v510 = vpop.xlane.xlu0 %509
        %v511 = vrcp.pop 256.0
        %v512 = vmul.f32 %v510, %v511
        %v513 = vsub.f32 %v502, %v512
        %v514 = vsub.f32 %v504, %v512
        %v515 = vmul.f32 %v513, %v513
        %v516 = vmul.f32 %v514, %v514
        %v517 = vadd.f32 %v515, %v516
        %518 = vadd.xlane.f32.xlu0 %v517
        %v519 = vpop.xlane.xlu0 %518
        %v520 = vmul.f32 %v519, %v511
        %v521 = vadd.f32 %v520, 1e-05
        %v522 = vrsqrt.pop %v521
        %v523 = vmul.f32 %v513, %v522
        %v524 = vmul.f32 %v514, %v522
        %v525 = vld [vmem:[%s3] sm:$0x3]
        %v527 = vlaneseq
        %v528 = vshrl.u32 %v527, 7
        %v529 = vsub.s32 0, %v528
        %v530 = vrot.slane %v525, %v529
        %v531 = vlaneseq
        %v532 = vshrl.u32 %v531, 7
        %v533 = vsub.s32 1, %v532
        %v534 = vrot.slane %v525, %v533
        %v537 = vmul.f32 %v523, %v530
        %v538 = vmul.f32 %v524, %v534
        %v539 = vld [vmem:[%s4] sm:$0x3]
        %v541 = vlaneseq
        %v542 = vshrl.u32 %v541, 7
        %v543 = vsub.s32 0, %v542
        %v544 = vrot.slane %v539, %v543
        %v545 = vlaneseq
        %v546 = vshrl.u32 %v545, 7
        %v547 = vsub.s32 1, %v546
        %v548 = vrot.slane %v539, %v547
        %v551 = vadd.f32 %v537, %v544
        %v552 = vadd.f32 %v538, %v548
        %553 = vst [vmem:[%s245] sm:$0xff] %v551
        %554 = vst [vmem:[%s245 + $0x8] sm:$0xff] %v552
        %s555 = smul.u32 2, %s19
        %p556 = scmp.lt.s32.totalorder %s555, 7
        %s557 = scalar_select %p556, %s555, 7
        %s558 = smul.addr %s557, 8
        %s559 = scalar_lea.vmem %s5, %s558
        // Predicated region
        $region45: #{image_proj_model_forward.1} parent=39 // pred_check
          %p560 = pneg %p147
        $region46: #{image_proj_model_forward.1} parent=39 // pred_check_branch
          %562 = sbr.rel (%p560) target = $region48
        $region47: #{image_proj_model_forward.1} parent=39 // pred_region
          %s563 = smul.u32 2, %s19
        $region48: #{image_proj_model_forward.1} parent=39 // pred_fallthru
          _
      $region40: #{image_proj_model_forward.1} parent=5 // pred_fallthru
        _
      %p564 = scmp.le.s32.totalorder 2, %s14
      // Predicated region
      $region49: #{image_proj_model_forward.1} parent=5 // pred_check
        %p565 = pneg %p564
      $region50: #{image_proj_model_forward.1} parent=5 // pred_check_branch
        %567 = sbr.rel (%p565) target = $region52
      $region51: #{image_proj_model_forward.1} parent=5 // pred_region
        %s568 = ssub.s32 %s14, 2
        // Predicated region
        $region53: #{image_proj_model_forward.1} parent=51 // pred_check
          %p569 = pneg %p153
        $region54: #{image_proj_model_forward.1} parent=51 // pred_check_branch
          %571 = sbr.rel (%p569) target = $region56
        $region55: #{image_proj_model_forward.1} parent=51 // pred_region
          %s572 = smul.u32 2, %s20
          %p573 = scmp.lt.s32.totalorder %s572, 7
          %s574 = scalar_select %p573, %s572, 7
          %s575 = smul.addr %s574, 8
          %s576 = scalar_lea.vmem %s5, %s575
        $region56: #{image_proj_model_forward.1} parent=51 // pred_fallthru
          _
      $region52: #{image_proj_model_forward.1} parent=5 // pred_fallthru
        _
    $region6: #{image_proj_model_forward.1} parent=1 // loop_footer
      %s18 = sadd.s32 1, %s14
    $region7: #{image_proj_model_forward.1} parent=1 // loop_footer_branch
      %13 = sbr.rel target = $region3
    $region8: #{image_proj_model_forward.1} parent=1 // loop_exit
      _
    %577 = vsyncpa [#allocation3], 1
    %s578 = scalar_lea.sflag [#allocation3], 1
    %579 = vsyncpa %s578, 1

</llo_original>
